<compile_context>
chip_gen: v6e
topology: v6e:2x2x1
jax: 0.10.0
libtpu: 0.0.40
codegen_flags: <defaults>
</compile_context>

<pallas_src>
import numpy as np
import jax
import jax.numpy as jnp
from jax.experimental import pallas as pl
from jax.experimental.pallas import tpu as pltpu

_LANE = 128


def _round_up(x, m):
    return (x + m - 1) // m * m


# -----------------------------------------------------------------------------
# Fused kernel: encoders + fusion head, single grid-less invocation
# -----------------------------------------------------------------------------
def _fused_kernel(a1_ref, a2_ref, i1_ref, i2_ref,
                  wa_ref, ba_ref, wv_ref, bv_ref,
                  w1_ref, b1_ref, w2_ref, b2_ref, o_ref):
    n = a1_ref.shape[0]
    bf16 = jnp.bfloat16

    # ---- audio stand-in encoder: Linear + ReLU (both clips in one bf16 dot) --
    aud = jnp.concatenate([a1_ref[...], a2_ref[...]], axis=0)          # (2N, K)
    feat_aud = jnp.maximum(
        jnp.dot(aud.astype(bf16), wa_ref[...],
                preferred_element_type=jnp.float32) + ba_ref[...], 0.0)

    # ---- vision stand-in encoder: GAP (XLU reduce over HW) + Linear + ReLU ---
    gap = jnp.concatenate([jnp.mean(i1_ref[...], axis=-1),
                           jnp.mean(i2_ref[...], axis=-1)], axis=0)    # (2N, C)
    feat_img = jnp.maximum(
        jnp.dot(gap.astype(bf16), wv_ref[...],
                preferred_element_type=jnp.float32) + bv_ref[...], 0.0)

    # ---- fusion Linear 1 via linearity: (fi + fa) @ W1 = fi@W1 + fa@W1 -------
    pa = jnp.dot(feat_aud.astype(bf16), w1_ref[...],
                 preferred_element_type=jnp.float32)                   # (2N, Dp)
    pv = jnp.dot(feat_img.astype(bf16), w1_ref[...],
                 preferred_element_type=jnp.float32)                   # (2N, Dp)
    pa1, pa2 = pa[:n], pa[n:]
    pv1, pv2 = pv[:n], pv[n:]
    # pairing order matches PyTorch: [fi1+fa1, fi1+fa2, fi2+fa1, fi2+fa2]
    h = jnp.maximum(
        jnp.concatenate([pv1 + pa1, pv1 + pa2, pv2 + pa1, pv2 + pa2],
                        axis=0) + b1_ref[...], 0.0)                    # (4N, Dp)

    # ---- fusion Linear 2 (D -> 1): VPU multiply + cross-lane reduce ----------
    logits = jnp.sum(h * w2_ref[...], axis=-1, keepdims=True) + b2_ref[...]
    # lane-dense store: broadcast the logit across all 128 lanes
    o_ref[...] = jnp.broadcast_to(logits, o_ref.shape)


def _fused_call(a1, a2, i1, i2, params):
    n = a1.shape[0]
    vmem = pl.BlockSpec(memory_space=pltpu.MemorySpace.VMEM)
    return pl.pallas_call(
        _fused_kernel,
        out_shape=jax.ShapeDtypeStruct((4 * n, _LANE), jnp.float32),
        in_specs=[vmem] * 12,
        out_specs=vmem,
    )(a1, a2, i1, i2,
      params["wa"], params["ba"], params["wv"], params["bv"],
      params["w1"], params["b1"], params["w2"], params["b2"])


# -----------------------------------------------------------------------------
# AVEncoderBinaryV2 forward
# -----------------------------------------------------------------------------
def av_encoder_binary_v2_forward(params, audio_1, audio_2, img_1, img_2):
    n = audio_1.shape[0]
    c = img_1.shape[1]
    hw = img_1.shape[2] * img_1.shape[3]

    # free reshape to a (N, C, HW) view (lane-dense HW axis for the DMA)
    i1 = img_1.reshape(n, c, hw).astype(jnp.float32)
    i2 = img_2.reshape(n, c, hw).astype(jnp.float32)

    blk = _fused_call(audio_1.astype(jnp.float32), audio_2.astype(jnp.float32),
                      i1, i2, params)                       # (4N, 128)

    # rows are [pair1 | pair2 | pair3 | pair4]; take lane 0 and interleave to
    # the torch layout cat([out_1..out_4], dim=-1).view(-1)
    pred = blk[:, 0].reshape(4, n).T.reshape(-1)            # (N*4,)

    # constant [1,0,0,1] target (int32, mirrors the torch integer target)
    target = jnp.asarray(np.tile(np.array([1, 0, 0, 1], np.int32), (n, 1)))
    return {"pred": pred, "target": target.reshape(-1)}


# -----------------------------------------------------------------------------
# Parameter init (feature dim padded once to 128 lanes; MXU weights in bf16)
# -----------------------------------------------------------------------------
def init_params(key, audio_dim, img_channels, feat_dim):
    ks = jax.random.split(key, 8)
    s = 0.02
    dp = _round_up(feat_dim, _LANE)

    wa = s * jax.random.normal(ks[0], (audio_dim, feat_dim), jnp.float32)
    ba = s * jax.random.normal(ks[1], (feat_dim,), jnp.float32)
    wv = s * jax.random.normal(ks[2], (img_channels, feat_dim), jnp.float32)
    bv = s * jax.random.normal(ks[3], (feat_dim,), jnp.float32)
    w1 = s * jax.random.normal(ks[4], (feat_dim, feat_dim), jnp.float32)
    b1 = s * jax.random.normal(ks[5], (feat_dim,), jnp.float32)
    w2 = s * jax.random.normal(ks[6], (feat_dim, 1), jnp.float32)
    b2 = s * jax.random.normal(ks[7], (1,), jnp.float32)

    # zero-pad the feature dim once (padded lanes are zero -> no leakage
    # through ReLU / the final reduction).  MXU weights stored bf16.
    wa_p = (jnp.zeros((audio_dim, dp), jnp.float32)
            .at[:, :feat_dim].set(wa).astype(jnp.bfloat16))
    wv_p = (jnp.zeros((img_channels, dp), jnp.float32)
            .at[:, :feat_dim].set(wv).astype(jnp.bfloat16))
    w1_p = (jnp.zeros((dp, dp), jnp.float32)
            .at[:feat_dim, :feat_dim].set(w1).astype(jnp.bfloat16))
    ba_p = jnp.zeros((1, dp), jnp.float32).at[0, :feat_dim].set(ba)
    bv_p = jnp.zeros((1, dp), jnp.float32).at[0, :feat_dim].set(bv)
    b1_p = jnp.zeros((1, dp), jnp.float32).at[0, :feat_dim].set(b1)
    w2_p = jnp.zeros((1, dp), jnp.float32).at[0, :feat_dim].set(w2[:, 0])
    b2_p = b2.reshape(1, 1)

    return {"wa": wa_p, "ba": ba_p, "wv": wv_p, "bv": bv_p,
            "w1": w1_p, "b1": b1_p, "w2": w2_p, "b2": b2_p}


# -----------------------------------------------------------------------------
# Pure-JAX reference (same stand-in semantics, f32) for a numerical check
# -----------------------------------------------------------------------------
def _reference_pred(params, audio_1, audio_2, img_1, img_2):
    wa = params["wa"].astype(jnp.float32)
    wv = params["wv"].astype(jnp.float32)
    w1 = params["w1"].astype(jnp.float32)

    fa1 = jax.nn.relu(audio_1 @ wa + params["ba"])
    fa2 = jax.nn.relu(audio_2 @ wa + params["ba"])
    fi1 = jax.nn.relu(jnp.mean(img_1, axis=(2, 3)) @ wv + params["bv"])
    fi2 = jax.nn.relu(jnp.mean(img_2, axis=(2, 3)) @ wv + params["bv"])

    def head(f):
        h = jax.nn.relu(f @ w1 + params["b1"])
        return jnp.sum(h * params["w2"], axis=-1, keepdims=True) + params["b2"]

    out = jnp.concatenate([head(fi1 + fa1), head(fi1 + fa2),
                           head(fi2 + fa1), head(fi2 + fa2)], axis=-1)
    return out.reshape(-1)


# -----------------------------------------------------------------------------
# Example run
# -----------------------------------------------------------------------------
if __name__ == "__main__":
    N, K = 2, 8          # batch, audio samples
    C, H, W = 4, 16, 16  # image channels / spatial
    D = 32               # pr.feat_dim

    key = jax.random.PRNGKey(0)
    kparams, k1, k2, k3, k4 = jax.random.split(key, 5)
    params = init_params(kparams, K, C, D)

    audio_1 = jax.random.normal(k1, (N, K), jnp.float32)
    audio_2 = jax.random.normal(k2, (N, K), jnp.float32)
    img_1 = jax.random.normal(k3, (N, C, H, W), jnp.float32)
    img_2 = jax.random.normal(k4, (N, C, H, W), jnp.float32)

    fwd = jax.jit(av_encoder_binary_v2_forward)
    out = fwd(params, audio_1, audio_2, img_1, img_2)
    jax.block_until_ready(out["pred"])
    jax.block_until_ready(out["target"])

    assert out["pred"].shape == (N * 4,)
    assert out["target"].shape == (N * 4,)

    ref = _reference_pred(params, audio_1, audio_2, img_1, img_2)
    np.testing.assert_allclose(np.asarray(out["pred"]), np.asarray(ref),
                               rtol=5e-2, atol=5e-4)
    print("KERNEL_OK")
</pallas_src>

<mosaic_0001>
module attributes {stable_mosaic.version = 11 : i64} {
  func.func @_fused_kernel(%arg0: memref<2x8xf32, #tpu.memory_space<vmem>>, %arg1: memref<2x8xf32, #tpu.memory_space<vmem>>, %arg2: memref<2x4x256xf32, #tpu.memory_space<vmem>>, %arg3: memref<2x4x256xf32, #tpu.memory_space<vmem>>, %arg4: memref<8x128xbf16, #tpu.memory_space<vmem>>, %arg5: memref<1x128xf32, #tpu.memory_space<vmem>>, %arg6: memref<4x128xbf16, #tpu.memory_space<vmem>>, %arg7: memref<1x128xf32, #tpu.memory_space<vmem>>, %arg8: memref<128x128xbf16, #tpu.memory_space<vmem>>, %arg9: memref<1x128xf32, #tpu.memory_space<vmem>>, %arg10: memref<1x128xf32, #tpu.memory_space<vmem>>, %arg11: memref<1x1xf32, #tpu.memory_space<vmem>>, %arg12: memref<8x128xf32, #tpu.memory_space<vmem>>) attributes {dimension_semantics = [], scalar_prefetch = 0 : i64, scratch_operands = 0 : i64, tpu.core_type = #tpu.core_type<tc>} {
    %c0 = arith.constant 0 : index
    %c0_0 = arith.constant 0 : index
    %0 = vector.load %arg0[%c0, %c0_0] : memref<2x8xf32, #tpu.memory_space<vmem>>, vector<2x8xf32>
    %c0_1 = arith.constant 0 : index
    %c0_2 = arith.constant 0 : index
    %1 = vector.load %arg1[%c0_1, %c0_2] : memref<2x8xf32, #tpu.memory_space<vmem>>, vector<2x8xf32>
    %2 = tpu.concatenate %0, %1 in 0 : vector<2x8xf32>, vector<2x8xf32> -> vector<4x8xf32>
    %3 = arith.truncf %2 : vector<4x8xf32> to vector<4x8xbf16>
    %c0_3 = arith.constant 0 : index
    %c0_4 = arith.constant 0 : index
    %4 = vector.load %arg4[%c0_3, %c0_4] : memref<8x128xbf16, #tpu.memory_space<vmem>>, vector<8x128xbf16>
    %cst = arith.constant dense<0.000000e+00> : vector<4x128xf32>
    %5 = tpu.matmul %3, %4, %cst {dimension_numbers = #tpu.dot_dimension_numbers<[1], [0], [0], [1], [0, 0, 1, 1], [], []>} : vector<4x8xbf16>, vector<8x128xbf16>, vector<4x128xf32> -> vector<4x128xf32>
    %c0_5 = arith.constant 0 : index
    %c0_6 = arith.constant 0 : index
    %6 = vector.load %arg5[%c0_5, %c0_6] : memref<1x128xf32, #tpu.memory_space<vmem>>, vector<1x128xf32>
    %7 = vector.broadcast %6 : vector<1x128xf32> to vector<4x128xf32>
    %8 = arith.addf %5, %7 : vector<4x128xf32>
    %cst_7 = arith.constant 0.000000e+00 : f32
    %9 = vector.broadcast %cst_7 : f32 to vector<4x128xf32>
    %10 = arith.maximumf %8, %9 : vector<4x128xf32>
    %c0_8 = arith.constant 0 : index
    %c0_9 = arith.constant 0 : index
    %c0_10 = arith.constant 0 : index
    %11 = vector.load %arg2[%c0_8, %c0_9, %c0_10] : memref<2x4x256xf32, #tpu.memory_space<vmem>>, vector<2x4x256xf32>
    %cst_11 = arith.constant dense<0.000000e+00> : vector<2x4xf32>
    %12 = vector.multi_reduction <add>, %11, %cst_11 [2] : vector<2x4x256xf32> to vector<2x4xf32>
    %cst_12 = arith.constant 2.560000e+02 : f32
    %13 = vector.broadcast %cst_12 : f32 to vector<2x4xf32>
    %14 = arith.divf %12, %13 : vector<2x4xf32>
    %c0_13 = arith.constant 0 : index
    %c0_14 = arith.constant 0 : index
    %c0_15 = arith.constant 0 : index
    %15 = vector.load %arg3[%c0_13, %c0_14, %c0_15] : memref<2x4x256xf32, #tpu.memory_space<vmem>>, vector<2x4x256xf32>
    %cst_16 = arith.constant dense<0.000000e+00> : vector<2x4xf32>
    %16 = vector.multi_reduction <add>, %15, %cst_16 [2] : vector<2x4x256xf32> to vector<2x4xf32>
    %cst_17 = arith.constant 2.560000e+02 : f32
    %17 = vector.broadcast %cst_17 : f32 to vector<2x4xf32>
    %18 = arith.divf %16, %17 : vector<2x4xf32>
    %19 = tpu.concatenate %14, %18 in 0 : vector<2x4xf32>, vector<2x4xf32> -> vector<4x4xf32>
    %20 = arith.truncf %19 : vector<4x4xf32> to vector<4x4xbf16>
    %c0_18 = arith.constant 0 : index
    %c0_19 = arith.constant 0 : index
    %21 = vector.load %arg6[%c0_18, %c0_19] : memref<4x128xbf16, #tpu.memory_space<vmem>>, vector<4x128xbf16>
    %cst_20 = arith.constant dense<0.000000e+00> : vector<4x128xf32>
    %22 = tpu.matmul %20, %21, %cst_20 {dimension_numbers = #tpu.dot_dimension_numbers<[1], [0], [0], [1], [0, 0, 1, 1], [], []>} : vector<4x4xbf16>, vector<4x128xbf16>, vector<4x128xf32> -> vector<4x128xf32>
    %c0_21 = arith.constant 0 : index
    %c0_22 = arith.constant 0 : index
    %23 = vector.load %arg7[%c0_21, %c0_22] : memref<1x128xf32, #tpu.memory_space<vmem>>, vector<1x128xf32>
    %24 = vector.broadcast %23 : vector<1x128xf32> to vector<4x128xf32>
    %25 = arith.addf %22, %24 : vector<4x128xf32>
    %cst_23 = arith.constant 0.000000e+00 : f32
    %26 = vector.broadcast %cst_23 : f32 to vector<4x128xf32>
    %27 = arith.maximumf %25, %26 : vector<4x128xf32>
    %28 = arith.truncf %10 : vector<4x128xf32> to vector<4x128xbf16>
    %c0_24 = arith.constant 0 : index
    %c0_25 = arith.constant 0 : index
    %29 = vector.load %arg8[%c0_24, %c0_25] : memref<128x128xbf16, #tpu.memory_space<vmem>>, vector<128x128xbf16>
    %cst_26 = arith.constant dense<0.000000e+00> : vector<4x128xf32>
    %30 = tpu.matmul %28, %29, %cst_26 {dimension_numbers = #tpu.dot_dimension_numbers<[1], [0], [0], [1], [0, 0, 1, 1], [], []>} : vector<4x128xbf16>, vector<128x128xbf16>, vector<4x128xf32> -> vector<4x128xf32>
    %31 = arith.truncf %27 : vector<4x128xf32> to vector<4x128xbf16>
    %c0_27 = arith.constant 0 : index
    %c0_28 = arith.constant 0 : index
    %32 = vector.load %arg8[%c0_27, %c0_28] : memref<128x128xbf16, #tpu.memory_space<vmem>>, vector<128x128xbf16>
    %cst_29 = arith.constant dense<0.000000e+00> : vector<4x128xf32>
    %33 = tpu.matmul %31, %32, %cst_29 {dimension_numbers = #tpu.dot_dimension_numbers<[1], [0], [0], [1], [0, 0, 1, 1], [], []>} : vector<4x128xbf16>, vector<128x128xbf16>, vector<4x128xf32> -> vector<4x128xf32>
    %34 = vector.extract_strided_slice %30 {offsets = [0, 0], sizes = [2, 128], strides = [1, 1]} : vector<4x128xf32> to vector<2x128xf32>
    %35 = vector.extract_strided_slice %30 {offsets = [2, 0], sizes = [2, 128], strides = [1, 1]} : vector<4x128xf32> to vector<2x128xf32>
    %36 = vector.extract_strided_slice %33 {offsets = [0, 0], sizes = [2, 128], strides = [1, 1]} : vector<4x128xf32> to vector<2x128xf32>
    %37 = vector.extract_strided_slice %33 {offsets = [2, 0], sizes = [2, 128], strides = [1, 1]} : vector<4x128xf32> to vector<2x128xf32>
    %38 = arith.addf %36, %34 : vector<2x128xf32>
    %39 = arith.addf %36, %35 : vector<2x128xf32>
    %40 = arith.addf %37, %34 : vector<2x128xf32>
    %41 = arith.addf %37, %35 : vector<2x128xf32>
    %42 = tpu.concatenate %38, %39, %40, %41 in 0 : vector<2x128xf32>, vector<2x128xf32>, vector<2x128xf32>, vector<2x128xf32> -> vector<8x128xf32>
    %c0_30 = arith.constant 0 : index
    %c0_31 = arith.constant 0 : index
    %43 = vector.load %arg9[%c0_30, %c0_31] : memref<1x128xf32, #tpu.memory_space<vmem>>, vector<1x128xf32>
    %44 = vector.broadcast %43 : vector<1x128xf32> to vector<8x128xf32>
    %45 = arith.addf %42, %44 : vector<8x128xf32>
    %cst_32 = arith.constant 0.000000e+00 : f32
    %46 = vector.broadcast %cst_32 : f32 to vector<8x128xf32>
    %47 = arith.maximumf %45, %46 : vector<8x128xf32>
    %c0_33 = arith.constant 0 : index
    %c0_34 = arith.constant 0 : index
    %48 = vector.load %arg10[%c0_33, %c0_34] : memref<1x128xf32, #tpu.memory_space<vmem>>, vector<1x128xf32>
    %49 = vector.broadcast %48 : vector<1x128xf32> to vector<8x128xf32>
    %50 = arith.mulf %47, %49 : vector<8x128xf32>
    %cst_35 = arith.constant dense<0.000000e+00> : vector<8xf32>
    %51 = vector.multi_reduction <add>, %50, %cst_35 [1] : vector<8x128xf32> to vector<8xf32>
    %52 = vector.shape_cast %51 : vector<8xf32> to vector<8x1xf32>
    %c0_36 = arith.constant 0 : index
    %c0_37 = arith.constant 0 : index
    %53 = vector.load %arg11[%c0_36, %c0_37] : memref<1x1xf32, #tpu.memory_space<vmem>>, vector<1x1xf32>
    %54 = vector.broadcast %53 : vector<1x1xf32> to vector<8x1xf32>
    %55 = arith.addf %52, %54 : vector<8x1xf32>
    %56 = vector.shape_cast %55 : vector<8x1xf32> to vector<8x1xf32>
    %57 = vector.broadcast %56 : vector<8x1xf32> to vector<8x128xf32>
    %c0_38 = arith.constant 0 : index
    %c0_39 = arith.constant 0 : index
    %58 = vector.load %arg12[%c0_38, %c0_39] : memref<8x128xf32, #tpu.memory_space<vmem>>, vector<8x128xf32>
    tpu.vector_store %arg12[%c0_38, %c0_39], %57 {strides = array<i32>} : memref<8x128xf32, #tpu.memory_space<vmem>>, vector<8x128xf32>,
    return
  }
}

</mosaic_0001>

<llo_original>
// kernel: squeeze.1
$region0: #{squeeze.1}
  %s0 = inlined_call_operand.vmem [shape: f32[8], index: 0, kind: input, shape index: {}]
  %s1 = inlined_call_operand.vmem [shape: f32[4,2], index: 1, kind: output, shape index: {}]
  $region1: #{squeeze.1} parent=0
    #allocation0 [shape = 'u8[4096]{0}', space=vmem, size = 0x1000, scoped, tag = 'scoped mem for output reshape']
    #allocation1 [shape = 'u8[4096]{0}', space=vmem, size = 0x1000, scoped, tag = 'scoped mem for input reshape']
    %s3 = sshll.u32 1, 1
    %s4 = ssub.s32 %s3, 1
    %v5 = vld [vmem:[%s0] sm:%s4]
    %6 = vst [vmem:[#allocation1] sm:%s4] %v5
    %v7 = vld [vmem:[#allocation1] sm:$0x1]
    %vm8 = vcmask 15360
    %9 = vst.msk [vmem:[#allocation0] sm:$0x1] %vm8, %v7
    %v10 = vld [vmem:[#allocation1] sm:$0x1]
    %11 = vrot.lane.b32.xlu0 %v10, 126
    %v12 = vpop.permute.xlu0 %11
    %vm13 = vcmask 15360
    %s14 = scalar_lea.vmem [#allocation0], 1
    %15 = vst.msk [vmem:[%s14] sm:$0x1] %vm13, %v12
    %v16 = vld [vmem:[#allocation1] sm:$0x1]
    %17 = vrot.lane.b32.xlu0 %v16, 124
    %v18 = vpop.permute.xlu0 %17
    %vm19 = vcmask 15360
    %s20 = scalar_lea.vmem [#allocation0], 2
    %21 = vst.msk [vmem:[%s20] sm:$0x1] %vm19, %v18
    %v22 = vld [vmem:[#allocation1] sm:$0x1]
    %23 = vrot.lane.b32.xlu0 %v22, 122
    %v24 = vpop.permute.xlu0 %23
    %vm25 = vcmask 15360
    %s26 = scalar_lea.vmem [#allocation0], 3
    %27 = vst.msk [vmem:[%s26] sm:$0x1] %vm25, %v24
    %s29 = sshll.u32 1, 4
    %s30 = ssub.s32 %s29, 1
    %v32 = vld [vmem:[#allocation0] sm:%s30]
    %s33 = sshll.u32 1, 4
    %s34 = ssub.s32 %s33, 1
    %35 = vst [vmem:[%s1] sm:%s34] %v32

// kernel: av_encoder_binary_v2_forward.1
$region0: #{av_encoder_binary_v2_forward.1}
  #allocation0 [shape = 'u32[]', space=smem, size = 0x4, offset = 0x4, fixed_abs, tag = 'smem constant byte address 0x4 - core index']
  #allocation1 [shape = 'u32[144,128]{1,0:T(1,128)}', space=vmem, size = 0x12000, scoped, tag = 'internal scratch']
  #allocation2 [shape = 'f32[1,1]{1,0:T(1,128)S(1)}', space=vmem, size = 0x200, scoped, tag = 'scoped memory for av_encoder_binary_v2_forward.1']
  %s0 = inlined_call_operand.vmem [shape: f32[2,8], index: 0, kind: input, shape index: {}]
  %s1 = inlined_call_operand.vmem [shape: f32[2,8], index: 1, kind: input, shape index: {}]
  %s2 = inlined_call_operand.vmem [shape: f32[2,4,256], index: 2, kind: input, shape index: {}]
  %s3 = inlined_call_operand.vmem [shape: f32[2,4,256], index: 3, kind: input, shape index: {}]
  %s4 = inlined_call_operand.vmem [shape: bf16[8,128], index: 4, kind: input, shape index: {}]
  %s5 = inlined_call_operand.vmem [shape: f32[1,128], index: 5, kind: input, shape index: {}]
  %s6 = inlined_call_operand.vmem [shape: bf16[4,128], index: 6, kind: input, shape index: {}]
  %s7 = inlined_call_operand.vmem [shape: f32[1,128], index: 7, kind: input, shape index: {}]
  %s8 = inlined_call_operand.vmem [shape: bf16[128,128], index: 8, kind: input, shape index: {}]
  %s9 = inlined_call_operand.vmem [shape: f32[1,128], index: 9, kind: input, shape index: {}]
  %s10 = inlined_call_operand.vmem [shape: f32[1,128], index: 10, kind: input, shape index: {}]
  %s11 = inlined_call_operand.<no memory space> [shape: f32[1,1], index: 11, kind: input, shape index: {}]
  %s12 = inlined_call_operand.vmem [shape: f32[8,128], index: 12, kind: output, shape index: {}]
  %s13 = sld [smem:[#allocation0]]
  $region58: #{av_encoder_binary_v2_forward.1} parent=0
    _
  %s15 = ssub.s32 1, %s13
  %s16 = scalar_select 0, %s15, %s13
  %v17 = vstv %s11
  %18 = vst [vmem:[#allocation2] sm:$0x1] %v17
  // Predicated region
  $region2: #{av_encoder_binary_v2_forward.1} parent=0 // pred_check
    _
  $region3: #{av_encoder_binary_v2_forward.1} parent=0 // pred_check_branch
    %20 = sbr.rel (0) target = $region5
  $region4: #{av_encoder_binary_v2_forward.1} parent=0 // pred_region
    _
  $region5: #{av_encoder_binary_v2_forward.1} parent=0 // pred_fallthru
    _
  // Predicated region
  $region6: #{av_encoder_binary_v2_forward.1} parent=0 // pred_check
    _
  $region7: #{av_encoder_binary_v2_forward.1} parent=0 // pred_check_branch
    %22 = sbr.rel (0) target = $region9
  $region8: #{av_encoder_binary_v2_forward.1} parent=0 // pred_region
    _
  $region9: #{av_encoder_binary_v2_forward.1} parent=0 // pred_fallthru
    _
  // Predicated region
  $region10: #{av_encoder_binary_v2_forward.1} parent=0 // pred_check
    _
  $region11: #{av_encoder_binary_v2_forward.1} parent=0 // pred_check_branch
    %24 = sbr.rel (0) target = $region13
  $region12: #{av_encoder_binary_v2_forward.1} parent=0 // pred_region
    _
  $region13: #{av_encoder_binary_v2_forward.1} parent=0 // pred_fallthru
    _
  // Predicated region
  $region14: #{av_encoder_binary_v2_forward.1} parent=0 // pred_check
    _
  $region15: #{av_encoder_binary_v2_forward.1} parent=0 // pred_check_branch
    %26 = sbr.rel (0) target = $region17
  $region16: #{av_encoder_binary_v2_forward.1} parent=0 // pred_region
    _
  $region17: #{av_encoder_binary_v2_forward.1} parent=0 // pred_fallthru
    _
  // Predicated region
  $region18: #{av_encoder_binary_v2_forward.1} parent=0 // pred_check
    _
  $region19: #{av_encoder_binary_v2_forward.1} parent=0 // pred_check_branch
    %28 = sbr.rel (0) target = $region21
  $region20: #{av_encoder_binary_v2_forward.1} parent=0 // pred_region
    _
  $region21: #{av_encoder_binary_v2_forward.1} parent=0 // pred_fallthru
    _
  // Predicated region
  $region22: #{av_encoder_binary_v2_forward.1} parent=0 // pred_check
    _
  $region23: #{av_encoder_binary_v2_forward.1} parent=0 // pred_check_branch
    %30 = sbr.rel (0) target = $region25
  $region24: #{av_encoder_binary_v2_forward.1} parent=0 // pred_region
    _
  $region25: #{av_encoder_binary_v2_forward.1} parent=0 // pred_fallthru
    _
  // Predicated region
  $region26: #{av_encoder_binary_v2_forward.1} parent=0 // pred_check
    _
  $region27: #{av_encoder_binary_v2_forward.1} parent=0 // pred_check_branch
    %32 = sbr.rel (0) target = $region29
  $region28: #{av_encoder_binary_v2_forward.1} parent=0 // pred_region
    _
  $region29: #{av_encoder_binary_v2_forward.1} parent=0 // pred_fallthru
    _
  // Predicated region
  $region30: #{av_encoder_binary_v2_forward.1} parent=0 // pred_check
    _
  $region31: #{av_encoder_binary_v2_forward.1} parent=0 // pred_check_branch
    %34 = sbr.rel (0) target = $region33
  $region32: #{av_encoder_binary_v2_forward.1} parent=0 // pred_region
    _
  $region33: #{av_encoder_binary_v2_forward.1} parent=0 // pred_fallthru
    _
  // Predicated region
  $region34: #{av_encoder_binary_v2_forward.1} parent=0 // pred_check
    _
  $region35: #{av_encoder_binary_v2_forward.1} parent=0 // pred_check_branch
    %36 = sbr.rel (0) target = $region37
  $region36: #{av_encoder_binary_v2_forward.1} parent=0 // pred_region
    _
  $region37: #{av_encoder_binary_v2_forward.1} parent=0 // pred_fallthru
    _
  // Predicated region
  $region38: #{av_encoder_binary_v2_forward.1} parent=0 // pred_check
    _
  $region39: #{av_encoder_binary_v2_forward.1} parent=0 // pred_check_branch
    %38 = sbr.rel (0) target = $region41
  $region40: #{av_encoder_binary_v2_forward.1} parent=0 // pred_region
    _
  $region41: #{av_encoder_binary_v2_forward.1} parent=0 // pred_fallthru
    _
  // Predicated region
  $region42: #{av_encoder_binary_v2_forward.1} parent=0 // pred_check
    _
  $region43: #{av_encoder_binary_v2_forward.1} parent=0 // pred_check_branch
    %40 = sbr.rel (0) target = $region45
  $region44: #{av_encoder_binary_v2_forward.1} parent=0 // pred_region
    _
  $region45: #{av_encoder_binary_v2_forward.1} parent=0 // pred_fallthru
    _
  // Predicated region
  $region46: #{av_encoder_binary_v2_forward.1} parent=0 // pred_check
    _
  $region47: #{av_encoder_binary_v2_forward.1} parent=0 // pred_check_branch
    %42 = sbr.rel (0) target = $region49
  $region48: #{av_encoder_binary_v2_forward.1} parent=0 // pred_region
    _
  $region49: #{av_encoder_binary_v2_forward.1} parent=0 // pred_fallthru
    _
  %v44 = vld [vmem:[%s0] sm:$0x3]
  %v45 = vld [vmem:[%s1] sm:$0x3]
  %v47 = vrot.slane %v45, 6
  %vm49 = vcmask 1041408
  %v50 = vsel %vm49, %v44, %v47
  %v51 = vpack.c.bf16 %v50, %v50
  %v52 = vld [vmem:[%s4] sm:$0xf]
  %v53 = vld [vmem:[%s5] sm:$0x1]
  %v55 = vlaneseq
  %v56 = vshrl.u32 %v55, 7
  %v57 = vsub.s32 0, %v56
  %v58 = vrot.slane %v53, %v57
  %vm60 = vcmask 64512
  %v62 = vsel %vm60, %v51, 0
  %vm64 = vcmask 1043456
  %v66 = vsel %vm64, %v52, 0
  %68 = vmatprep.subr.bf16.mxu0 0
  %69 = vmatpush1.bf16.msra.mxu0 0
  %70 = vmatprep.subr.bf16.mxu0 0
  %71 = vmatpush1.bf16.msra.mxu0 0
  %72 = vmatprep.subr.bf16.mxu0 0
  %73 = vmatpush1.bf16.msra.mxu0 0
  %74 = vmatprep.subr.bf16.mxu0 0
  %75 = vmatpush1.bf16.msra.mxu0 0
  %76 = vmatprep.subr.bf16.mxu0 0
  %77 = vmatpush1.bf16.msra.mxu0 0
  %78 = vmatprep.subr.bf16.mxu0 0
  %79 = vmatpush1.bf16.msra.mxu0 0
  %80 = vmatprep.subr.bf16.mxu0 0
  %81 = vmatpush1.bf16.msra.mxu0 0
  %82 = vmatprep.subr.bf16.mxu0 0
  %83 = vmatpush1.bf16.msra.mxu0 %v66
  %84 = vmatprep.subr.bf16.mxu0 0
  %85 = vmatpush2.bf16.msra.mxu0 0
  %86 = vmatprep.subr.bf16.mxu0 0
  %87 = vmatpush2.bf16.msra.mxu0 0
  %88 = vmatprep.subr.bf16.mxu0 0
  %89 = vmatpush2.bf16.msra.mxu0 0
  %90 = vmatprep.subr.bf16.mxu0 0
  %91 = vmatpush2.bf16.msra.mxu0 0
  %92 = vmatprep.subr.bf16.mxu0 0
  %93 = vmatpush2.bf16.msra.mxu0 0
  %94 = vmatprep.subr.bf16.mxu0 0
  %95 = vmatpush2.bf16.msra.mxu0 0
  %96 = vmatprep.subr.bf16.mxu0 0
  %97 = vmatpush2.bf16.msra.mxu0 0
  %98 = vmatprep.subr.bf16.mxu0 0
  %99 = vmatpush2.bf16.msra.mxu0 0
  %100 = vmatprep.mubr.bf16.mxu0 0
  %101 = vmatmul.mubr.bf16.gmra.mxu0 %v62
  %v102 = vpop.f32.mrf.mxu0
  %v103 = vadd.f32 %v58, %v102
  %v104 = vpop.f32.mrf.mxu0
  %v105 = vpop.f32.mrf.mxu0
  %v106 = vpop.f32.mrf.mxu0
  %107 = vdwg.mxu0
  %v108 = vmax.f32 %v103, 0.0
  %v109 = vld [vmem:[%s2] sm:$0xff]
  %v110 = vld [vmem:[%s2 + $0x8] sm:$0xff]
  %v113 = vcombine.high %v109, %v109
  %v114 = vcombine.high %v110, %v110
  %v117 = vsel %vm64, %v109, 0.0
  %v118 = vsel %vm64, %v113, 0.0
  %v119 = vadd.f32 %v117, %v118
  %120 = vadd.xlane.f32.xlu0 %v119
  %v121 = vpop.xlane.xlu0 %120
  %v122 = vsel %vm64, %v110, 0.0
  %v123 = vsel %vm64, %v114, 0.0
  %v124 = vadd.f32 %v122, %v123
  %125 = vadd.xlane.f32.xlu0 %v124
  %v126 = vpop.xlane.xlu0 %125
  %v127 = vrcp.pop 256.0
  %v128 = vmul.f32 %v121, %v127
  %v129 = vmul.f32 %v126, %v127
  %v130 = vld [vmem:[%s3] sm:$0xff]
  %v131 = vld [vmem:[%s3 + $0x8] sm:$0xff]
  %v134 = vcombine.high %v130, %v130
  %v135 = vcombine.high %v131, %v131
  %v138 = vsel %vm64, %v130, 0.0
  %v139 = vsel %vm64, %v134, 0.0
  %v140 = vadd.f32 %v138, %v139
  %141 = vadd.xlane.f32.xlu0 %v140
  %v142 = vpop.xlane.xlu0 %141
  %v143 = vsel %vm64, %v131, 0.0
  %v144 = vsel %vm64, %v135, 0.0
  %v145 = vadd.f32 %v143, %v144
  %146 = vadd.xlane.f32.xlu0 %v145
  %v147 = vpop.xlane.xlu0 %146
  %v148 = vmul.f32 %v142, %v127
  %v149 = vmul.f32 %v147, %v127
  %v152 = vlaneseq
  %v153 = vand.u32 %v152, 127
  %v154 = vlaneseq
  %v155 = vshrl.u32 %v154, 7
  %v156 = vsub.s32 %v153, %v155
  %v157 = vrot.slane %v128, %v156
  %v158 = vlaneseq
  %v159 = vshrl.u32 %v158, 7
  %v160 = vsub.s32 %v153, %v159
  %v161 = vrot.slane %v129, %v160
  %vm162 = vcmask 1041409
  %v163 = vsel %vm162, %v161, %v157
  %v167 = vlaneseq
  %v168 = vshrl.u32 %v167, 7
  %v169 = vsub.s32 %v153, %v168
  %v170 = vrot.slane %v148, %v169
  %v171 = vlaneseq
  %v172 = vshrl.u32 %v171, 7
  %v173 = vsub.s32 %v153, %v172
  %v174 = vrot.slane %v149, %v173
  %vm175 = vcmask 1043459
  %v176 = vsel %vm175, %v174, %v170
  %v178 = vsel %vm49, %v163, %v176
  %v179 = vpack.c.bf16 %v178, %v178
  %v180 = vld [vmem:[%s6] sm:$0x3]
  %v181 = vld [vmem:[%s7] sm:$0x1]
  %v183 = vlaneseq
  %v184 = vshrl.u32 %v183, 7
  %v185 = vsub.s32 0, %v184
  %v186 = vrot.slane %v181, %v185
  %vm188 = vcmask 31744
  %v190 = vsel %vm188, %v179, 0
  %v193 = vsel %vm49, %v180, 0
  %195 = vmatprep.subr.bf16.mxu0 0
  %196 = vmatpush1.bf16.msra.mxu0 0
  %197 = vmatprep.subr.bf16.mxu0 0
  %198 = vmatpush1.bf16.msra.mxu0 0
  %199 = vmatprep.subr.bf16.mxu0 0
  %200 = vmatpush1.bf16.msra.mxu0 0
  %201 = vmatprep.subr.bf16.mxu0 0
  %202 = vmatpush1.bf16.msra.mxu0 0
  %203 = vmatprep.subr.bf16.mxu0 0
  %204 = vmatpush1.bf16.msra.mxu0 0
  %205 = vmatprep.subr.bf16.mxu0 0
  %206 = vmatpush1.bf16.msra.mxu0 0
  %207 = vmatprep.subr.bf16.mxu0 0
  %208 = vmatpush1.bf16.msra.mxu0 0
  %209 = vmatprep.subr.bf16.mxu0 0
  %210 = vmatpush1.bf16.msra.mxu0 %v193
  %211 = vmatprep.subr.bf16.mxu0 0
  %212 = vmatpush2.bf16.msra.mxu0 0
  %213 = vmatprep.subr.bf16.mxu0 0
  %214 = vmatpush2.bf16.msra.mxu0 0
  %215 = vmatprep.subr.bf16.mxu0 0
  %216 = vmatpush2.bf16.msra.mxu0 0
  %217 = vmatprep.subr.bf16.mxu0 0
  %218 = vmatpush2.bf16.msra.mxu0 0
  %219 = vmatprep.subr.bf16.mxu0 0
  %220 = vmatpush2.bf16.msra.mxu0 0
  %221 = vmatprep.subr.bf16.mxu0 0
  %222 = vmatpush2.bf16.msra.mxu0 0
  %223 = vmatprep.subr.bf16.mxu0 0
  %224 = vmatpush2.bf16.msra.mxu0 0
  %225 = vmatprep.subr.bf16.mxu0 0
  %226 = vmatpush2.bf16.msra.mxu0 0
  %227 = vmatprep.mubr.bf16.mxu0 0
  %228 = vmatmul.mubr.bf16.gmra.mxu0 %v190
  %v229 = vpop.f32.mrf.mxu0
  %v230 = vadd.f32 %v186, %v229
  %v231 = vpop.f32.mrf.mxu0
  %v232 = vpop.f32.mrf.mxu0
  %v233 = vpop.f32.mrf.mxu0
  %234 = vdwg.mxu0
  %v235 = vmax.f32 %v230, 0.0
  %v236 = vpack.c.bf16 %v108, %v108
  %v237 = vld [vmem:[%s8] sm:$0xf]
  %v238 = vld [vmem:[%s8 + $0x4] sm:$0xf]
  %v239 = vld [vmem:[%s8 + $0x8] sm:$0xf]
  %v240 = vld [vmem:[%s8 + $0xc] sm:$0xf]
  %v241 = vld [vmem:[%s8 + $0x10] sm:$0xf]
  %v242 = vld [vmem:[%s8 + $0x14] sm:$0xf]
  %v243 = vld [vmem:[%s8 + $0x18] sm:$0xf]
  %v244 = vld [vmem:[%s8 + $0x1c] sm:$0xf]
  %v245 = vld [vmem:[%s8 + $0x20] sm:$0xf]
  %v246 = vld [vmem:[%s8 + $0x24] sm:$0xf]
  %v247 = vld [vmem:[%s8 + $0x28] sm:$0xf]
  %v248 = vld [vmem:[%s8 + $0x2c] sm:$0xf]
  %v249 = vld [vmem:[%s8 + $0x30] sm:$0xf]
  %v250 = vld [vmem:[%s8 + $0x34] sm:$0xf]
  %v251 = vld [vmem:[%s8 + $0x38] sm:$0xf]
  %v252 = vld [vmem:[%s8 + $0x3c] sm:$0xf]
  %v269 = vunpack.c.l.b16 %v237
  %v270 = vunpack.c.l.b16 %v238
  %v271 = vunpack.c.l.b16 %v239
  %v272 = vunpack.c.l.b16 %v240
  %v273 = vunpack.c.l.b16 %v241
  %v274 = vunpack.c.l.b16 %v242
  %v275 = vunpack.c.l.b16 %v243
  %v276 = vunpack.c.l.b16 %v244
  %v277 = vunpack.c.l.b16 %v245
  %v278 = vunpack.c.l.b16 %v246
  %v279 = vunpack.c.l.b16 %v247
  %v280 = vunpack.c.l.b16 %v248
  %v281 = vunpack.c.l.b16 %v249
  %v282 = vunpack.c.l.b16 %v250
  %v283 = vunpack.c.l.b16 %v251
  %v284 = vunpack.c.l.b16 %v252
  %v285 = vpack.c.b16 %v270, %v269
  %v286 = vpack.c.b16 %v272, %v271
  %v287 = vpack.c.b16 %v274, %v273
  %v288 = vpack.c.b16 %v276, %v275
  %v289 = vpack.c.b16 %v278, %v277
  %v290 = vpack.c.b16 %v280, %v279
  %v291 = vpack.c.b16 %v282, %v281
  %v292 = vpack.c.b16 %v284, %v283
  %301 = vmatprep.subr.bf16.mxu0 0
  %302 = vmatpush1.bf16.msra.mxu0 %v292
  %303 = vmatprep.subr.bf16.mxu0 0
  %304 = vmatpush1.bf16.msra.mxu0 %v291
  %305 = vmatprep.subr.bf16.mxu0 0
  %306 = vmatpush1.bf16.msra.mxu0 %v290
  %307 = vmatprep.subr.bf16.mxu0 0
  %308 = vmatpush1.bf16.msra.mxu0 %v289
  %309 = vmatprep.subr.bf16.mxu0 0
  %310 = vmatpush1.bf16.msra.mxu0 %v288
  %311 = vmatprep.subr.bf16.mxu0 0
  %312 = vmatpush1.bf16.msra.mxu0 %v287
  %313 = vmatprep.subr.bf16.mxu0 0
  %314 = vmatpush1.bf16.msra.mxu0 %v286
  %315 = vmatprep.subr.bf16.mxu0 0
  %316 = vmatpush1.bf16.msra.mxu0 %v285
  %317 = vmatprep.subr.bf16.mxu0 0
  %318 = vmatpush2.bf16.msra.mxu0 0
  %319 = vmatprep.subr.bf16.mxu0 0
  %320 = vmatpush2.bf16.msra.mxu0 0
  %321 = vmatprep.subr.bf16.mxu0 0
  %322 = vmatpush2.bf16.msra.mxu0 0
  %323 = vmatprep.subr.bf16.mxu0 0
  %324 = vmatpush2.bf16.msra.mxu0 0
  %325 = vmatprep.subr.bf16.mxu0 0
  %326 = vmatpush2.bf16.msra.mxu0 0
  %327 = vmatprep.subr.bf16.mxu0 0
  %328 = vmatpush2.bf16.msra.mxu0 0
  %329 = vmatprep.subr.bf16.mxu0 0
  %330 = vmatpush2.bf16.msra.mxu0 0
  %331 = vmatprep.subr.bf16.mxu0 0
  %332 = vmatpush2.bf16.msra.mxu0 0
  %333 = vmatprep.mubr.bf16.mxu0 0
  %334 = vmatmul.mubr.bf16.gmra.mxu0 %v236
  %v335 = vpop.f32.mrf.mxu0
  %v336 = vadd.f32 0.0, %v335
  %v337 = vpop.f32.mrf.mxu0
  %v338 = vpop.f32.mrf.mxu0
  %v339 = vpop.f32.mrf.mxu0
  %340 = vdwg.mxu0
  %v341 = vpack.c.bf16 %v235, %v235
  %342 = vmatprep.subr.bf16.mxu0 0
  %343 = vmatpush1.bf16.msra.mxu0 %v292
  %344 = vmatprep.subr.bf16.mxu0 0
  %345 = vmatpush1.bf16.msra.mxu0 %v291
  %346 = vmatprep.subr.bf16.mxu0 0
  %347 = vmatpush1.bf16.msra.mxu0 %v290
  %348 = vmatprep.subr.bf16.mxu0 0
  %349 = vmatpush1.bf16.msra.mxu0 %v289
  %350 = vmatprep.subr.bf16.mxu0 0
  %351 = vmatpush1.bf16.msra.mxu0 %v288
  %352 = vmatprep.subr.bf16.mxu0 0
  %353 = vmatpush1.bf16.msra.mxu0 %v287
  %354 = vmatprep.subr.bf16.mxu0 0
  %355 = vmatpush1.bf16.msra.mxu0 %v286
  %356 = vmatprep.subr.bf16.mxu0 0
  %357 = vmatpush1.bf16.msra.mxu0 %v285
  %358 = vmatprep.subr.bf16.mxu0 0
  %359 = vmatpush2.bf16.msra.mxu0 0
  %360 = vmatprep.subr.bf16.mxu0 0
  %361 = vmatpush2.bf16.msra.mxu0 0
  %362 = vmatprep.subr.bf16.mxu0 0
  %363 = vmatpush2.bf16.msra.mxu0 0
  %364 = vmatprep.subr.bf16.mxu0 0
  %365 = vmatpush2.bf16.msra.mxu0 0
  %366 = vmatprep.subr.bf16.mxu0 0
  %367 = vmatpush2.bf16.msra.mxu0 0
  %368 = vmatprep.subr.bf16.mxu0 0
  %369 = vmatpush2.bf16.msra.mxu0 0
  %370 = vmatprep.subr.bf16.mxu0 0
  %371 = vmatpush2.bf16.msra.mxu0 0
  %372 = vmatprep.subr.bf16.mxu0 0
  %373 = vmatpush2.bf16.msra.mxu0 0
  %374 = vmatprep.mubr.bf16.mxu0 0
  %375 = vmatmul.mubr.bf16.gmra.mxu0 %v341
  %v376 = vpop.f32.mrf.mxu0
  %v377 = vadd.f32 0.0, %v376
  %v378 = vpop.f32.mrf.mxu0
  %v379 = vpop.f32.mrf.mxu0
  %v380 = vpop.f32.mrf.mxu0
  %381 = vdwg.mxu0
  %v382 = vadd.f32 %v377, %v336
  %v384 = vrot.slane %v336, 2
  %v386 = vadd.f32 %v377, %v384
  %v387 = vrot.slane %v336, 6
  %v389 = vadd.f32 %v377, %v387
  %v391 = vrot.slane %v386, 6
  %v394 = vrot.slane %v389, 6
  %v397 = vrot.slane %v382, 4
  %v399 = vsel %vm49, %v382, %v391
  %v400 = vsel %vm64, %v399, %v394
  %vm401 = vcmask 1045504
  %v402 = vsel %vm401, %v400, %v397
  %v403 = vld [vmem:[%s9] sm:$0x1]
  %v405 = vlaneseq
  %v406 = vshrl.u32 %v405, 7
  %v407 = vsub.s32 0, %v406
  %v408 = vrot.slane %v403, %v407
  %v410 = vadd.f32 %v402, %v408
  %v411 = vmax.f32 %v410, 0.0
  %v412 = vld [vmem:[%s10] sm:$0x1]
  %v414 = vlaneseq
  %v415 = vshrl.u32 %v414, 7
  %v416 = vsub.s32 0, %v415
  %v417 = vrot.slane %v412, %v416
  %v419 = vmul.f32 %v411, %v417
  %420 = vadd.xlane.f32.xlu0 %v419
  %v421 = vpop.xlane.xlu0 %420
  %v422 = vld [vmem:[#allocation2] sm:$0x1]
  %v424 = vlaneseq
  %v425 = vshrl.u32 %v424, 7
  %v426 = vsub.s32 0, %v425
  %v427 = vrot.slane %v422, %v426
  %v429 = vadd.f32 %v421, %v427
  %431 = vset.pattern.permute.xlu0 0
  %432 = vperm.xlu0 %431, %v429
  %v433 = vpop.permute.xlu0 %432
  %435 = vst [vmem:[%s12] sm:$0xff] %v433
  // Predicated region
  $region50: #{av_encoder_binary_v2_forward.1} parent=0 // pred_check
    _
  $region51: #{av_encoder_binary_v2_forward.1} parent=0 // pred_check_branch
    %437 = sbr.rel (0) target = $region53
  $region52: #{av_encoder_binary_v2_forward.1} parent=0 // pred_region
    _
  $region53: #{av_encoder_binary_v2_forward.1} parent=0 // pred_fallthru
    _
  // Predicated region
  $region54: #{av_encoder_binary_v2_forward.1} parent=0 // pred_check
    _
  $region55: #{av_encoder_binary_v2_forward.1} parent=0 // pred_check_branch
    %439 = sbr.rel (0) target = $region57
  $region56: #{av_encoder_binary_v2_forward.1} parent=0 // pred_region
    _
  $region57: #{av_encoder_binary_v2_forward.1} parent=0 // pred_fallthru
    _

</llo_original>
